<compile_context>
chip_gen: v7x
topology: tpu7x:2x2x1
jax: 0.10.0
libtpu: 0.0.40
codegen_flags: <defaults>
</compile_context>

<pallas_src>
import functools

import jax
import jax.numpy as jnp
import numpy as np
from jax.experimental import pallas as pl
from jax.experimental.pallas import tpu as pltpu

_LANE = 128
_SUBLANE = 8


def _round_up(x, m):
    return ((x + m - 1) // m) * m


def _dueling_kernel(x_ref, w_ref, b_ref, out_ref, *, head_pad, compute_dtype):
    """One fused matmul + f32 epilogue per batch tile.

    w_ref columns [0, head_pad)          : folded A_est weights (A in lanes < n_act,
                                           exact zeros elsewhere).
    w_ref columns [head_pad, 2*head_pad) : folded V_est weight replicated across all
                                           lanes (V arrives already lane-broadcast).
    """
    x = x_ref[...].astype(compute_dtype)
    head = jnp.dot(x, w_ref[...], preferred_element_type=jnp.float32) + b_ref[...]
    a = jnp.maximum(head[:, :head_pad], 0.0)   # relu(A_est(x)); pad lanes -> 0
    v = head[:, head_pad:]                     # V, already replicated per lane
    # Lanes < n_act hold Q0 = V - relu(A); lanes >= n_act hold exact V (used by
    # the wrapper to recover A for the global 'mean'/'avg' correction).
    out_ref[...] = (v - a).astype(out_ref.dtype)


def pack_params(raw, n_act, compute_dtype=jnp.bfloat16):
    """One-time fold of the activation-free backbone into the heads (float64)."""
    f = lambda t: np.asarray(t, dtype=np.float64)
    w1, b1 = f(raw['w1']), f(raw['b1'])    # [obs, hid], [1, hid]
    w2, b2 = f(raw['w2']), f(raw['b2'])    # [hid, hid], [1, hid]
    wa, ba = f(raw['wa']), f(raw['ba'])    # [hid, act], [1, act]
    wv, bv = f(raw['wv']), f(raw['bv'])    # [hid, 1],   [1, 1]
    obs_dim = w1.shape[0]
    # >= 1 spare lane past n_act guaranteed (the V-recovery column).
    head_pad = _round_up(n_act + 1, _LANE)

    w12 = w1 @ w2                          # valid: no activation in linears[:-1]
    b12 = b1 @ w2 + b2
    wA, bA = w12 @ wa, b12 @ wa + ba       # folded A head
    wV, bV = w12 @ wv, b12 @ wv + bv       # folded V head

    W = np.zeros((obs_dim, 2 * head_pad), np.float64)
    W[:, :n_act] = wA                      # A slab (lanes >= n_act stay exact zero)
    W[:, head_pad:] = wV                   # V slab, replicated across all 128 lanes
    B = np.zeros((1, 2 * head_pad), np.float64)
    B[0, :n_act] = bA[0]
    B[0, head_pad:] = bV[0, 0]

    return dict(w=jnp.asarray(W, dtype=compute_dtype),   # bf16 into the MXU (f32 acc)
                b=jnp.asarray(B, dtype=jnp.float32))     # bias stays f32 (f32 epilogue)


@functools.partial(jax.jit,
                   static_argnames=('n_act', 'dueling_way', 'block_b', 'out_dtype'))
def dueling_dqn_forward(obs, w, b, *, n_act, dueling_way='avg',
                        block_b=512, out_dtype=jnp.float32):
    """obs: [B, obs_dim] float32.  w/b: output of pack_params.  Returns [B, n_act]."""
    assert dueling_way in ('native', 'mean', 'avg')
    batch, obs_dim = obs.shape
    head_pad = w.shape[1] // 2

    # Batch tiling: one >=8-row tile for small batches; block_b-row tiles
    # (pipelined, 'parallel' grid) for large ones.  Weights are VMEM-resident.
    blk = min(block_b, _round_up(batch, _SUBLANE))
    b_pad = _round_up(batch, blk)
    n_tiles = b_pad // blk

    x = obs
    if b_pad != batch:
        x = jnp.pad(x, ((0, b_pad - batch), (0, 0)))

    kernel = functools.partial(_dueling_kernel, head_pad=head_pad,
                               compute_dtype=w.dtype)

    flops = 2 * b_pad * obs_dim * (2 * head_pad)
    bytes_acc = (b_pad * obs_dim * x.dtype.itemsize
                 + w.size * w.dtype.itemsize + b.size * b.dtype.itemsize
                 + b_pad * head_pad * np.dtype(out_dtype).itemsize)

    out = pl.pallas_call(
        kernel,
        grid=(n_tiles,),
        in_specs=[
            pl.BlockSpec((blk, obs_dim), lambda i: (i, 0)),   # obs tile (pipelined)
            pl.BlockSpec(w.shape, lambda i: (0, 0)),          # folded weights: resident
            pl.BlockSpec(b.shape, lambda i: (0, 0)),          # folded bias:    resident
        ],
        out_specs=pl.BlockSpec((blk, head_pad), lambda i: (i, 0)),
        out_shape=jax.ShapeDtypeStruct((b_pad, head_pad), out_dtype),
        compiler_params=pltpu.CompilerParams(dimension_semantics=("parallel",)),
        cost_estimate=pl.CostEstimate(flops=flops, transcendentals=0,
                                      bytes_accessed=bytes_acc),
    )(x, w, b)

    q0 = out[:batch, :n_act]                     # Q0 = V - relu(A)
    if dueling_way == 'native':
        return q0
    # Output lane n_act stores exact V (zero A weights/bias there), so A = V - Q0.
    # The global correction is additive:  V - (A - s) == (V - A) + s.
    v = out[:batch, n_act:n_act + 1]
    a = (v - q0).astype(jnp.float32)
    s = jnp.max(a) if dueling_way == 'mean' else jnp.mean(a)
    return (q0.astype(jnp.float32) + s).astype(out_dtype)


# ----------------------------- references / tests -----------------------------

def _np64(t):
    return np.asarray(jnp.asarray(t, jnp.float32), dtype=np.float64)


def _reference_forward(obs, raw, dueling_way):
    """float64 numpy mirror of the PyTorch Dueling_dqn.forward (the spec)."""
    f = lambda t: np.asarray(t, dtype=np.float64)
    h = f(obs) @ f(raw['w1']) + f(raw['b1'])
    h = h @ f(raw['w2']) + f(raw['b2'])
    a = np.maximum(h @ f(raw['wa']) + f(raw['ba']), 0.0)
    v = h @ f(raw['wv']) + f(raw['bv'])
    if dueling_way == 'mean':
        a = a - np.max(a)
    elif dueling_way == 'avg':
        a = a - np.mean(a)
    return v - a


def _packed_reference_native(obs, packed, n_act):
    """Exact f64 model of what the kernel computes from the PACKED params
    (tight structural check of fold / padding / V-recovery, independent of the
    bf16 rounding introduced by the fold itself)."""
    W, B = _np64(packed['w']), _np64(packed['b'])
    head_pad = W.shape[1] // 2
    x = _np64(jnp.asarray(obs, packed['w'].dtype))   # same bf16 rounding as kernel
    head = x @ W + B
    q = head[:, head_pad:] - np.maximum(head[:, :head_pad], 0.0)
    return q[:, :n_act]


def _init_linear(key, fan_in, fan_out):
    # Mimic torch.nn.Linear default init: U(-1/sqrt(fan_in), +1/sqrt(fan_in)).
    kw, kb = jax.random.split(key)
    bound = 1.0 / np.sqrt(fan_in)
    w = jax.random.uniform(kw, (fan_in, fan_out), jnp.float32, -bound, bound)
    b = jax.random.uniform(kb, (1, fan_out), jnp.float32, -bound, bound)
    return w, b


if __name__ == "__main__":
    # layer_infor = [obs_dim, hidden, hidden, n_actions]
    B, OBS, HID, ACT = 2, 16, 32, 8

    key = jax.random.PRNGKey(0)
    k_obs, k1, k2, ka, kv, k_big = jax.random.split(key, 6)

    obs = jax.random.normal(k_obs, (B, OBS), jnp.float32)
    w1, b1 = _init_linear(k1, OBS, HID)
    w2, b2 = _init_linear(k2, HID, HID)
    wa, ba = _init_linear(ka, HID, ACT)
    wv, bv = _init_linear(kv, HID, 1)
    raw = dict(w1=w1, b1=b1, w2=w2, b2=b2, wa=wa, ba=ba, wv=wv, bv=bv)

    packed = pack_params(raw, ACT, compute_dtype=jnp.bfloat16)

    # End-to-end tolerance for bf16 MXU compute (vs float64 reference); the
    # structural check below verifies the kernel tightly.
    RTOL, ATOL = 2e-2, 4e-2

    # 1) Tight structural check of fold / packing / padding / V-recovery ('native').
    out = jax.block_until_ready(
        dueling_dqn_forward(obs, packed['w'], packed['b'], n_act=ACT,
                            dueling_way='native'))
    ref = _packed_reference_native(obs, packed, ACT)
    np.testing.assert_allclose(_np64(out), ref, rtol=1e-4, atol=1e-5)

    # 2) Small batch, all three dueling modes, vs the PyTorch-mirror reference.
    for way in ('native', 'mean', 'avg'):
        out = jax.block_until_ready(
            dueling_dqn_forward(obs, packed['w'], packed['b'], n_act=ACT,
                                dueling_way=way))
        np.testing.assert_allclose(_np64(out), _reference_forward(obs, raw, way),
                                   rtol=RTOL, atol=ATOL)

    # 3) Larger batch: default 512-row tile (single tile) and an explicit
    #    multi-tile grid (block_b=128 -> 3 tiles, last one padded).  The GLOBAL
    #    max/mean is computed in fused XLA on the wrapper side.
    obs_big = jax.random.normal(k_big, (300, OBS), jnp.float32)
    for way, bb in (('mean', 512), ('avg', 128), ('mean', 128)):
        out = jax.block_until_ready(
            dueling_dqn_forward(obs_big, packed['w'], packed['b'], n_act=ACT,
                                dueling_way=way, block_b=bb))
        np.testing.assert_allclose(_np64(out), _reference_forward(obs_big, raw, way),
                                   rtol=RTOL, atol=ATOL)

    # 4) Optional bf16 output store (halves HBM writeback at large B).
    out = jax.block_until_ready(
        dueling_dqn_forward(obs_big, packed['w'], packed['b'], n_act=ACT,
                            dueling_way='avg', out_dtype=jnp.bfloat16))
    np.testing.assert_allclose(_np64(out), _reference_forward(obs_big, raw, 'avg'),
                               rtol=3e-2, atol=6e-2)

    print("KERNEL_OK")
</pallas_src>

<mosaic_0001>
module attributes {stable_mosaic.version = 11 : i64} {
  func.func @_dueling_kernel(%arg0: i32, %arg1: memref<8x16xf32, #tpu.memory_space<vmem>>, %arg2: memref<16x256xbf16, #tpu.memory_space<vmem>>, %arg3: memref<1x256xf32, #tpu.memory_space<vmem>>, %arg4: memref<8x128xf32, #tpu.memory_space<vmem>>) attributes {dimension_semantics = [#tpu.dimension_semantics<parallel>], iteration_bounds = array<i64: 1>, scalar_prefetch = 0 : i64, scratch_operands = 0 : i64, tpu.core_type = #tpu.core_type<tc>, window_params = [{transform_indices = @transform_0, window_bounds = array<i64: 8, 16>}, {pipeline_mode = #tpu.pipeline_mode<synchronous>, transform_indices = @transform_1, window_bounds = array<i64: 16, 256>}, {pipeline_mode = #tpu.pipeline_mode<synchronous>, transform_indices = @transform_2, window_bounds = array<i64: 1, 256>}, {transform_indices = @transform_3, window_bounds = array<i64: 8, 128>}]} {
    %c0 = arith.constant 0 : index
    %c0_0 = arith.constant 0 : index
    %0 = vector.load %arg1[%c0, %c0_0] : memref<8x16xf32, #tpu.memory_space<vmem>>, vector<8x16xf32>
    %1 = arith.truncf %0 : vector<8x16xf32> to vector<8x16xbf16>
    %c0_1 = arith.constant 0 : index
    %c0_2 = arith.constant 0 : index
    %2 = vector.load %arg2[%c0_1, %c0_2] : memref<16x256xbf16, #tpu.memory_space<vmem>>, vector<16x256xbf16>
    %cst = arith.constant dense<0.000000e+00> : vector<8x256xf32>
    %3 = tpu.matmul %1, %2, %cst {dimension_numbers = #tpu.dot_dimension_numbers<[1], [0], [0], [1], [0, 0, 1, 1], [], []>} : vector<8x16xbf16>, vector<16x256xbf16>, vector<8x256xf32> -> vector<8x256xf32>
    %c0_3 = arith.constant 0 : index
    %c0_4 = arith.constant 0 : index
    %4 = vector.load %arg3[%c0_3, %c0_4] : memref<1x256xf32, #tpu.memory_space<vmem>>, vector<1x256xf32>
    %5 = vector.broadcast %4 : vector<1x256xf32> to vector<8x256xf32>
    %6 = arith.addf %3, %5 : vector<8x256xf32>
    %7 = vector.extract_strided_slice %6 {offsets = [0, 0], sizes = [8, 128], strides = [1, 1]} : vector<8x256xf32> to vector<8x128xf32>
    %cst_5 = arith.constant 0.000000e+00 : f32
    %8 = vector.broadcast %cst_5 : f32 to vector<8x128xf32>
    %9 = arith.maximumf %7, %8 : vector<8x128xf32>
    %10 = vector.extract_strided_slice %6 {offsets = [0, 128], sizes = [8, 128], strides = [1, 1]} : vector<8x256xf32> to vector<8x128xf32>
    %11 = arith.subf %10, %9 : vector<8x128xf32>
    %c0_6 = arith.constant 0 : index
    %c0_7 = arith.constant 0 : index
    %12 = vector.load %arg4[%c0_6, %c0_7] : memref<8x128xf32, #tpu.memory_space<vmem>>, vector<8x128xf32>
    tpu.vector_store %arg4[%c0_6, %c0_7], %11 {strides = array<i32>} : memref<8x128xf32, #tpu.memory_space<vmem>>, vector<8x128xf32>,
    return
  }
  func.func @transform_0(%arg0: i32) -> (i32, i32) {
    %c0_i32 = arith.constant 0 : i32
    %c0_i32_0 = arith.constant 0 : i32
    return %arg0, %c0_i32 : i32, i32
  }
  func.func @transform_1(%arg0: i32) -> (i32, i32) {
    %c0_i32 = arith.constant 0 : i32
    %c0_i32_0 = arith.constant 0 : i32
    %c0_i32_1 = arith.constant 0 : i32
    return %c0_i32, %c0_i32_0 : i32, i32
  }
  func.func @transform_2(%arg0: i32) -> (i32, i32) {
    %c0_i32 = arith.constant 0 : i32
    %c0_i32_0 = arith.constant 0 : i32
    %c0_i32_1 = arith.constant 0 : i32
    return %c0_i32, %c0_i32_0 : i32, i32
  }
  func.func @transform_3(%arg0: i32) -> (i32, i32) {
    %c0_i32 = arith.constant 0 : i32
    %c0_i32_0 = arith.constant 0 : i32
    return %arg0, %c0_i32 : i32, i32
  }
}

</mosaic_0001>

<llo_original>
// kernel: dueling_dqn_forward.1
$region0: #{dueling_dqn_forward.1}
  #allocation0 [shape = 'u32[]', space=smem, size = 0x4, offset = 0x4, fixed_abs, tag = 'smem constant byte address 0x4 - core index']
  #allocation1 [shape = 'u32[144,128]{1,0:T(1,128)}', space=vmem, size = 0x12000, scoped, tag = 'internal scratch']
  %s0 = inlined_call_operand.vmem [shape: f32[8,16], index: 0, kind: input, shape index: {}]
  %s1 = inlined_call_operand.hbm [shape: bf16[16,256], index: 1, kind: input, shape index: {}]
  %s2 = inlined_call_operand.vmem [shape: f32[1,256], index: 2, kind: input, shape index: {}]
  %s3 = inlined_call_operand.vmem [shape: f32[8,128], index: 3, kind: output, shape index: {}]
  %s4 = sld [smem:[#allocation0]]
  $region26: #{dueling_dqn_forward.1} parent=0
    _
  %s6 = ssub.s32 1, %s4
  %s7 = scalar_select 0, %s6, %s4
  $region1: #{dueling_dqn_forward.1} parent=0
    #allocation2 [shape = 'u8[8192]{0}', space=vmem, size = 0x2000, scoped, tag = 'input window, operand 1, single buffered']
    #allocation3 [shape = 's32[1]{0}', space=sflag, size = 0x4, scoped, tag = 'scoped memory for dueling_dqn_forward.1']
    %8 = vsyncpa [#allocation3], 0
    // Predicated region
    $region2: #{dueling_dqn_forward.1} parent=1 // pred_check
      _
    $region3: #{dueling_dqn_forward.1} parent=1 // pred_check_branch
      %10 = sbr.rel (0) target = $region5
    $region4: #{dueling_dqn_forward.1} parent=1 // pred_region
      _
    $region5: #{dueling_dqn_forward.1} parent=1 // pred_fallthru
      _
    // Predicated region
    $region6: #{dueling_dqn_forward.1} parent=1 // pred_check
      _
    $region7: #{dueling_dqn_forward.1} parent=1 // pred_check_branch
      %12 = sbr.rel (0) target = $region9
    $region8: #{dueling_dqn_forward.1} parent=1 // pred_region
      %s14 = ssub.s32 256, 256
      %15 = vsyncadd [#allocation3], %s14
      %s16 = sshll.u32 [#allocation2], 4
      %s17 = int_to_ptr.vmem [resolvable:$true] %s16
      %22 = dma.hbm_to_vmem [thread:$0]  %s1, 256, %s17, [#allocation3], 128, 128, 8
    $region9: #{dueling_dqn_forward.1} parent=1 // pred_fallthru
      _
    // Predicated region
    $region10: #{dueling_dqn_forward.1} parent=1 // pred_check
      _
    $region11: #{dueling_dqn_forward.1} parent=1 // pred_check_branch
      %24 = sbr.rel (0) target = $region13
    $region12: #{dueling_dqn_forward.1} parent=1 // pred_region
      _
    $region13: #{dueling_dqn_forward.1} parent=1 // pred_fallthru
      _
    // Predicated region
    $region14: #{dueling_dqn_forward.1} parent=1 // pred_check
      _
    $region15: #{dueling_dqn_forward.1} parent=1 // pred_check_branch
      %26 = sbr.rel (0) target = $region17
    $region16: #{dueling_dqn_forward.1} parent=1 // pred_region
      %27 = dma.done [#allocation3], 256
    $region17: #{dueling_dqn_forward.1} parent=1 // pred_fallthru
      _
    %v29 = vld [vmem:[%s0] sm:$0xff]
    %v30 = vpack.c.bf16 %v29, %v29
    %v31 = vld [vmem:[#allocation2] sm:$0xff]
    %v32 = vld [vmem:[#allocation2 + $0x8] sm:$0xff]
    %v33 = vld [vmem:[%s2] sm:$0x3]
    %v35 = vlaneseq
    %v36 = vshrl.u32 %v35, 7
    %v37 = vsub.s32 0, %v36
    %v38 = vrot.slane %v33, %v37
    %v39 = vlaneseq
    %v40 = vshrl.u32 %v39, 7
    %v41 = vsub.s32 1, %v40
    %v42 = vrot.slane %v33, %v41
    %v47 = vunpack.c.l.b16 %v31
    %v48 = vunpack.c.h.b16 %v31
    %v49 = vunpack.c.l.b16 %v32
    %v50 = vunpack.c.h.b16 %v32
    %v51 = vpack.c.b16 %v49, %v47
    %v52 = vpack.c.b16 %v50, %v48
    %vm55 = vcmask 130048
    %v57 = vsel %vm55, %v30, 0
    %59 = vmatprep.subr.bf16.mxu0 %v52
    %60 = vmatpush1.bf16.msra.mxu0 %v51
    %61 = vmatprep.subr.bf16.mxu0 0
    %62 = vmatpush1.bf16.msra.mxu0 0
    %63 = vmatprep.subr.bf16.mxu0 0
    %64 = vmatpush1.bf16.msra.mxu0 0
    %65 = vmatprep.subr.bf16.mxu0 0
    %66 = vmatpush1.bf16.msra.mxu0 0
    %67 = vmatprep.subr.bf16.mxu0 0
    %68 = vmatpush1.bf16.msra.mxu0 0
    %69 = vmatprep.subr.bf16.mxu0 0
    %70 = vmatpush1.bf16.msra.mxu0 0
    %71 = vmatprep.subr.bf16.mxu0 0
    %72 = vmatpush1.bf16.msra.mxu0 0
    %73 = vmatprep.subr.bf16.mxu0 0
    %74 = vmatpush1.bf16.msra.mxu0 0
    %75 = vmatprep.subr.bf16.mxu0 0
    %76 = vmatpush1.bf16.msra.mxu0 0
    %77 = vmatprep.subr.bf16.mxu0 0
    %78 = vmatpush1.bf16.msra.mxu0 0
    %79 = vmatprep.subr.bf16.mxu0 0
    %80 = vmatpush1.bf16.msra.mxu0 0
    %81 = vmatprep.subr.bf16.mxu0 0
    %82 = vmatpush1.bf16.msra.mxu0 0
    %83 = vmatprep.subr.bf16.mxu0 0
    %84 = vmatpush1.bf16.msra.mxu0 0
    %85 = vmatprep.subr.bf16.mxu0 0
    %86 = vmatpush1.bf16.msra.mxu0 0
    %87 = vmatprep.subr.bf16.mxu0 0
    %88 = vmatpush1.bf16.msra.mxu0 0
    %89 = vmatprep.subr.bf16.mxu0 0
    %90 = vmatpush1.bf16.msra.mxu0 0
    %91 = vmatprep.mubr.bf16.mxu0 0
    %92 = vmatmul.mubr.bf16.gmra.mrb[0].mxu0 %v57
    %v93 = vpop.f32.mrb[0].mxu0
    %v94 = vadd.f32 %v38, %v93
    %v95 = vpop.f32.mrb[0].mxu0
    %v96 = vadd.f32 %v42, %v95
    %v97 = vpop.f32.mrb[0].mxu0
    %v98 = vpop.f32.mrb[0].mxu0
    %99 = vdwg.mxu0
    %v100 = vmax.f32 %v94, 0.0
    %v101 = vsub.f32 %v96, %v100
    %102 = vst [vmem:[%s3] sm:$0xff] %v101
    // Predicated region
    $region18: #{dueling_dqn_forward.1} parent=1 // pred_check
      _
    $region19: #{dueling_dqn_forward.1} parent=1 // pred_check_branch
      %104 = sbr.rel (0) target = $region21
    $region20: #{dueling_dqn_forward.1} parent=1 // pred_region
      _
    $region21: #{dueling_dqn_forward.1} parent=1 // pred_fallthru
      _
    // Predicated region
    $region22: #{dueling_dqn_forward.1} parent=1 // pred_check
      _
    $region23: #{dueling_dqn_forward.1} parent=1 // pred_check_branch
      %106 = sbr.rel (0) target = $region25
    $region24: #{dueling_dqn_forward.1} parent=1 // pred_region
      _
    $region25: #{dueling_dqn_forward.1} parent=1 // pred_fallthru
      _
    %107 = vsyncpa [#allocation3], 1

</llo_original>
